<compile_context>
chip_gen: v6e
topology: v6e:2x2x1
jax: 0.10.0
libtpu: 0.0.40
codegen_flags: <defaults>
</compile_context>

<pallas_src>
import jax
import jax.numpy as jnp
from jax.experimental import pallas as pl
from jax.experimental.pallas import tpu as pltpu

_PAIRWISE_EPS = 1e-6                       # torch pairwise_distance default eps
_SUBLANE = 8
_TARGET_BLOCK_BYTES = 8 * 1024 * 1024      # per-input tile; 2 inputs x 2 bufs = 32 MiB
_MAX_TILE_ROWS = 8192


def _round_up(x, m):
    return (x + m - 1) // m * m


def _choose_batch_tile(batch, feat, itemsize):
    """Pick a batch-tile (multiple of 8) so one input tile is ~8 MiB."""
    rows = _TARGET_BLOCK_BYTES // max(1, feat * itemsize)
    rows = max(_SUBLANE, (rows // _SUBLANE) * _SUBLANE)
    rows = min(rows, _MAX_TILE_ROWS)
    rows = min(rows, _round_up(batch, _SUBLANE))
    return rows


def _vmem_limit_bytes():
    """Generation-aware VMEM budget: 64 MiB on 128-MiB parts, else 48 MiB."""
    try:
        cap = pltpu.get_tpu_info().vmem_capacity_bytes
    except Exception:  # pragma: no cover - conservative fallback
        cap = None
    if cap is not None and cap >= 128 * 1024 * 1024:
        return 64 * 1024 * 1024            # v5e / v6e
    return 48 * 1024 * 1024                # v7x (64 MiB physical) or unknown


def _make_kernel(margin):
    margin = float(margin)

    def kernel(o1_ref, o2_ref, lab_ref, out_ref):
        o1 = o1_ref[...].astype(jnp.float32)
        o2 = o2_ref[...].astype(jnp.float32)
        y = lab_ref[...].astype(jnp.float32)                  # (tile_b, 1)

        # pairwise_distance: ||o1 - o2 + eps||_2 along the feature axis.
        diff = o1 - o2 + _PAIRWISE_EPS                        # (tile_b, D)
        d2 = jnp.sum(diff * diff, axis=-1, keepdims=True)     # (tile_b, 1)
        d = jnp.sqrt(d2)                                      # EUP (hinge only)
        hinge = jnp.maximum(margin - d, 0.0)

        # loss_i = (1 - y) * D^2 + y * clamp(margin - D, 0)^2
        out_ref[...] = (1.0 - y) * d2 + y * (hinge * hinge)   # (tile_b, 1)

    return kernel


def contrastive_loss(output1, output2, label, margin=1.0, *, block_rows=None):
    """Pallas TPU implementation of ContrastiveLoss.forward.

    output1, output2: (B, D) float arrays (f32 or bf16 — upcast to f32 in-kernel)
    label:            (B,) or (B, 1) float array of {0, 1}
    Returns a scalar float32 loss.
    """
    B, D = output1.shape
    itemsize = jnp.dtype(output1.dtype).itemsize

    if block_rows is None:
        tile_b = _choose_batch_tile(B, D, itemsize)
    else:
        tile_b = max(_SUBLANE, _round_up(int(block_rows), _SUBLANE))
        tile_b = min(tile_b, _round_up(B, _SUBLANE))

    num_blocks = pl.cdiv(B, tile_b)        # partial last block handled by Pallas
    label2d = jnp.reshape(label, (B, 1)).astype(jnp.float32)

    cost = pl.CostEstimate(
        flops=4 * B * D + 10 * B,
        transcendentals=B,
        bytes_accessed=2 * B * D * itemsize + 8 * B,
    )

    per_sample = pl.pallas_call(
        _make_kernel(margin),
        out_shape=jax.ShapeDtypeStruct((B, 1), jnp.float32),
        grid_spec=pltpu.PrefetchScalarGridSpec(
            num_scalar_prefetch=0,
            grid=(num_blocks,),
            in_specs=[
                pl.BlockSpec((tile_b, D), lambda i: (i, 0)),
                pl.BlockSpec((tile_b, D), lambda i: (i, 0)),
                pl.BlockSpec((tile_b, 1), lambda i: (i, 0)),
            ],
            out_specs=pl.BlockSpec((tile_b, 1), lambda i: (i, 0)),
        ),
        compiler_params=pltpu.CompilerParams(
            dimension_semantics=("parallel",),   # independent per-block outputs
            vmem_limit_bytes=_vmem_limit_bytes(),
        ),
        cost_estimate=cost,
    )(output1, output2, label2d)

    # Trivial final reduction (B f32 values) done by XLA outside the kernel.
    return jnp.sum(per_sample) * (1.0 / B)


def _reference_loss(o1, o2, label, margin):
    diff = o1.astype(jnp.float32) - o2.astype(jnp.float32) + _PAIRWISE_EPS
    d = jnp.sqrt(jnp.sum(diff * diff, axis=-1))
    return jnp.mean((1.0 - label) * d ** 2
                    + label * jnp.maximum(margin - d, 0.0) ** 2)


if __name__ == "__main__":
    key = jax.random.PRNGKey(0)
    k1, k2, k3, k4, k5, k6, k7, k8, k9 = jax.random.split(key, 9)

    # Case 1: single-block path (tiny test shapes).
    B, D = 8, 32
    o1 = jax.random.normal(k1, (B, D), dtype=jnp.float32)
    o2 = jax.random.normal(k2, (B, D), dtype=jnp.float32)
    y = (jax.random.uniform(k3, (B,)) > 0.5).astype(jnp.float32)

    loss = jax.block_until_ready(contrastive_loss(o1, o2, y, margin=1.0))
    ref = _reference_loss(o1, o2, y, 1.0)
    assert jnp.allclose(loss, ref, rtol=1e-5, atol=1e-6), (loss, ref)

    # Case 2: multi-block grid with a partial last block (no wrapper padding).
    B2, D2 = 20, 48
    o1b = jax.random.normal(k4, (B2, D2), dtype=jnp.float32)
    o2b = jax.random.normal(k5, (B2, D2), dtype=jnp.float32)
    yb = (jax.random.uniform(k6, (B2,)) > 0.5).astype(jnp.float32)

    loss2 = jax.block_until_ready(
        contrastive_loss(o1b, o2b, yb, margin=1.5, block_rows=8))
    ref2 = _reference_loss(o1b, o2b, yb, 1.5)
    assert jnp.allclose(loss2, ref2, rtol=1e-5, atol=1e-6), (loss2, ref2)

    # Case 3: bf16 inputs (HBM-bound => half the bytes); f32 compute in-kernel.
    B3, D3 = 16, 64
    o1c = jax.random.normal(k7, (B3, D3), dtype=jnp.bfloat16)
    o2c = jax.random.normal(k8, (B3, D3), dtype=jnp.bfloat16)
    yc = (jax.random.uniform(k9, (B3,)) > 0.5).astype(jnp.float32)

    loss3 = jax.block_until_ready(contrastive_loss(o1c, o2c, yc, margin=1.0))
    ref3 = _reference_loss(o1c, o2c, yc, 1.0)
    assert jnp.allclose(loss3, ref3, rtol=2e-2, atol=2e-2), (loss3, ref3)

    print("KERNEL_OK")
</pallas_src>

<mosaic_0001>
module attributes {stable_mosaic.version = 11 : i64} {
  func.func @kernel(%arg0: i32, %arg1: memref<8x32xf32, #tpu.memory_space<vmem>>, %arg2: memref<8x32xf32, #tpu.memory_space<vmem>>, %arg3: memref<8x1xf32, #tpu.memory_space<vmem>>, %arg4: memref<8x1xf32, #tpu.memory_space<vmem>>) attributes {dimension_semantics = [#tpu.dimension_semantics<parallel>], iteration_bounds = array<i64: 1>, scalar_prefetch = 0 : i64, scratch_operands = 0 : i64, tpu.core_type = #tpu.core_type<tc>, window_params = [{transform_indices = @transform_0, window_bounds = array<i64: 8, 32>}, {transform_indices = @transform_1, window_bounds = array<i64: 8, 32>}, {transform_indices = @transform_2, window_bounds = array<i64: 8, 1>}, {transform_indices = @transform_3, window_bounds = array<i64: 8, 1>}]} {
    %c0 = arith.constant 0 : index
    %c0_0 = arith.constant 0 : index
    %0 = vector.load %arg1[%c0, %c0_0] : memref<8x32xf32, #tpu.memory_space<vmem>>, vector<8x32xf32>
    %c0_1 = arith.constant 0 : index
    %c0_2 = arith.constant 0 : index
    %1 = vector.load %arg2[%c0_1, %c0_2] : memref<8x32xf32, #tpu.memory_space<vmem>>, vector<8x32xf32>
    %c0_3 = arith.constant 0 : index
    %c0_4 = arith.constant 0 : index
    %2 = vector.load %arg3[%c0_3, %c0_4] : memref<8x1xf32, #tpu.memory_space<vmem>>, vector<8x1xf32>
    %3 = arith.subf %0, %1 : vector<8x32xf32>
    %cst = arith.constant 9.99999997E-7 : f32
    %4 = vector.broadcast %cst : f32 to vector<8x32xf32>
    %5 = arith.addf %3, %4 : vector<8x32xf32>
    %6 = arith.mulf %5, %5 : vector<8x32xf32>
    %cst_5 = arith.constant dense<0.000000e+00> : vector<8xf32>
    %7 = vector.multi_reduction <add>, %6, %cst_5 [1] : vector<8x32xf32> to vector<8xf32>
    %8 = vector.shape_cast %7 : vector<8xf32> to vector<8x1xf32>
    %9 = math.sqrt %8 : vector<8x1xf32>
    %cst_6 = arith.constant 1.000000e+00 : f32
    %10 = vector.broadcast %cst_6 : f32 to vector<8x1xf32>
    %11 = arith.subf %10, %9 : vector<8x1xf32>
    %cst_7 = arith.constant 0.000000e+00 : f32
    %12 = vector.broadcast %cst_7 : f32 to vector<8x1xf32>
    %13 = arith.maximumf %11, %12 : vector<8x1xf32>
    %cst_8 = arith.constant 1.000000e+00 : f32
    %14 = vector.broadcast %cst_8 : f32 to vector<8x1xf32>
    %15 = arith.subf %14, %2 : vector<8x1xf32>
    %16 = arith.mulf %15, %8 : vector<8x1xf32>
    %17 = arith.mulf %13, %13 : vector<8x1xf32>
    %18 = arith.mulf %2, %17 : vector<8x1xf32>
    %19 = arith.addf %16, %18 : vector<8x1xf32>
    %c0_9 = arith.constant 0 : index
    %c0_10 = arith.constant 0 : index
    %20 = vector.load %arg4[%c0_9, %c0_10] : memref<8x1xf32, #tpu.memory_space<vmem>>, vector<8x1xf32>
    tpu.vector_store %arg4[%c0_9, %c0_10], %19 {strides = array<i32>} : memref<8x1xf32, #tpu.memory_space<vmem>>, vector<8x1xf32>,
    return
  }
  func.func @transform_0(%arg0: i32) -> (i32, i32) {
    %c0_i32 = arith.constant 0 : i32
    %c0_i32_0 = arith.constant 0 : i32
    return %arg0, %c0_i32 : i32, i32
  }
  func.func @transform_1(%arg0: i32) -> (i32, i32) {
    %c0_i32 = arith.constant 0 : i32
    %c0_i32_0 = arith.constant 0 : i32
    return %arg0, %c0_i32 : i32, i32
  }
  func.func @transform_2(%arg0: i32) -> (i32, i32) {
    %c0_i32 = arith.constant 0 : i32
    %c0_i32_0 = arith.constant 0 : i32
    return %arg0, %c0_i32 : i32, i32
  }
  func.func @transform_3(%arg0: i32) -> (i32, i32) {
    %c0_i32 = arith.constant 0 : i32
    %c0_i32_0 = arith.constant 0 : i32
    return %arg0, %c0_i32 : i32, i32
  }
}

</mosaic_0001>

<llo_original>
// kernel: tpu_custom_call.1
$region0: #{tpu_custom_call.1}
  #allocation0 [shape = 'u32[]', space=smem, size = 0x4, offset = 0x4, fixed_abs, tag = 'smem constant byte address 0x4 - core index']
  #allocation1 [shape = 'u32[144,128]{1,0:T(1,128)}', space=vmem, size = 0x12000, scoped, tag = 'internal scratch']
  %s0 = inlined_call_operand.vmem [shape: f32[8,32], index: 0, kind: input, shape index: {}]
  %s1 = inlined_call_operand.hbm [shape: f32[8,32], index: 1, kind: input, shape index: {}]
  %s2 = inlined_call_operand.vmem [shape: f32[8,1], index: 2, kind: input, shape index: {}]
  %s3 = inlined_call_operand.vmem [shape: f32[8,1], index: 3, kind: output, shape index: {}]
  %s4 = sld [smem:[#allocation0]]
  $region26: #{tpu_custom_call.1} parent=0
    _
  %s6 = ssub.s32 1, %s4
  %s7 = scalar_select 0, %s6, %s4
  $region1: #{tpu_custom_call.1} parent=0
    #allocation2 [shape = 'u8[4096]{0}', space=vmem, size = 0x1000, scoped, tag = 'input window, operand 1, single buffered']
    #allocation3 [shape = 's32[1]{0}', space=sflag, size = 0x4, scoped, tag = 'scoped memory for tpu_custom_call.1']
    %8 = vsyncpa [#allocation3], 0
    // Predicated region
    $region2: #{tpu_custom_call.1} parent=1 // pred_check
      _
    $region3: #{tpu_custom_call.1} parent=1 // pred_check_branch
      %10 = sbr.rel (0) target = $region5
    $region4: #{tpu_custom_call.1} parent=1 // pred_region
      _
    $region5: #{tpu_custom_call.1} parent=1 // pred_fallthru
      _
    // Predicated region
    $region6: #{tpu_custom_call.1} parent=1 // pred_check
      _
    $region7: #{tpu_custom_call.1} parent=1 // pred_check_branch
      %12 = sbr.rel (0) target = $region9
    $region8: #{tpu_custom_call.1} parent=1 // pred_region
      %s14 = ssub.s32 128, 128
      %15 = vsyncadd [#allocation3], %s14
      %s17 = sshll.u32 [#allocation2], 4
      %s18 = int_to_ptr.vmem [resolvable:$true] %s17
      %20 = dma.hbm_to_vmem [thread:$0]  %s1, 128, %s18, [#allocation3]
    $region9: #{tpu_custom_call.1} parent=1 // pred_fallthru
      _
    // Predicated region
    $region10: #{tpu_custom_call.1} parent=1 // pred_check
      _
    $region11: #{tpu_custom_call.1} parent=1 // pred_check_branch
      %22 = sbr.rel (0) target = $region13
    $region12: #{tpu_custom_call.1} parent=1 // pred_region
      _
    $region13: #{tpu_custom_call.1} parent=1 // pred_fallthru
      _
    // Predicated region
    $region14: #{tpu_custom_call.1} parent=1 // pred_check
      _
    $region15: #{tpu_custom_call.1} parent=1 // pred_check_branch
      %24 = sbr.rel (0) target = $region17
    $region16: #{tpu_custom_call.1} parent=1 // pred_region
      %25 = dma.done [#allocation3], 128
    $region17: #{tpu_custom_call.1} parent=1 // pred_fallthru
      _
    %v26 = vld [vmem:[%s0] sm:$0xff]
    %v27 = vld [vmem:[#allocation2] sm:$0xff]
    %v28 = vld [vmem:[%s2] sm:$0xff]
    %v29 = vsub.f32 %v26, %v27
    %v30 = vadd.f32 %v29, 1e-06
    %v31 = vmul.f32 %v30, %v30
    %vm32 = vcmask 261120
    %v33 = vsel %vm32, %v31, 0.0
    %34 = vadd.xlane.f32.xlu0 %v33
    %v35 = vpop.xlane.xlu0 %34
    %v36 = vrsqrt.pop %v35
    %v37 = vmul.f32 %v35, %v36
    %vm38 = vcmp.eq.f32.partialorder %v35, inf
    %v39 = vsel %vm38, %v35, %v37
    %vm40 = vcmp.eq.f32.partialorder %v35, 0.0
    %v41 = vand.u32 %v35, 2147483648
    %v42 = vsel %vm40, %v41, %v39
    %v43 = vsub.f32 1.0, %v42
    %v44 = vmax.f32 %v43, 0.0
    %v45 = vsub.f32 1.0, %v28
    %v46 = vmul.f32 %v45, %v35
    %v47 = vmul.f32 %v44, %v44
    %v48 = vmul.f32 %v28, %v47
    %v49 = vadd.f32 %v46, %v48
    %vm50 = vcmask 7168
    %51 = vst.msk [vmem:[%s3] sm:$0xff] %vm50, %v49
    // Predicated region
    $region18: #{tpu_custom_call.1} parent=1 // pred_check
      _
    $region19: #{tpu_custom_call.1} parent=1 // pred_check_branch
      %53 = sbr.rel (0) target = $region21
    $region20: #{tpu_custom_call.1} parent=1 // pred_region
      _
    $region21: #{tpu_custom_call.1} parent=1 // pred_fallthru
      _
    // Predicated region
    $region22: #{tpu_custom_call.1} parent=1 // pred_check
      _
    $region23: #{tpu_custom_call.1} parent=1 // pred_check_branch
      %55 = sbr.rel (0) target = $region25
    $region24: #{tpu_custom_call.1} parent=1 // pred_region
      _
    $region25: #{tpu_custom_call.1} parent=1 // pred_fallthru
      _
    %56 = vsyncpa [#allocation3], 1

</llo_original>
